<compile_context>
chip_gen: v6e
topology: v6e:2x2x1
jax: 0.10.0
libtpu: 0.0.40
codegen_flags: <defaults>
</compile_context>

<pallas_src>
import jax
import jax.numpy as jnp
from jax.experimental import pallas as pl
from jax.experimental.pallas import tpu as pltpu


_GRAY_W = (0.2989, 0.587, 0.114)


def _contrast_kernel(scal_ref, img_ref, out_ref):
    # scal_ref: SMEM scalar-prefetch, shape (1,) float32 = [factor]
    # img_ref / out_ref: VMEM block of shape (bn, 3*HW), channels on lanes
    f = scal_ref[0]
    hw = img_ref.shape[1] // 3

    x = img_ref[...].astype(jnp.float32)                     # single full-tile load

    # Per-image grayscale mean over (H, W):
    #   mean(0.2989 R + 0.587 G + 0.114 B) = sum_c w_c * mean_hw(channel_c)
    # Channel slices are lane-aligned when HW % 128 == 0 (typical image sizes).
    inv_hw = 1.0 / float(hw)
    mean = (
        _GRAY_W[0] * jnp.sum(x[:, 0 * hw:1 * hw], axis=-1, keepdims=True)
        + _GRAY_W[1] * jnp.sum(x[:, 1 * hw:2 * hw], axis=-1, keepdims=True)
        + _GRAY_W[2] * jnp.sum(x[:, 2 * hw:3 * hw], axis=-1, keepdims=True)
    ) * inv_hw                                               # (bn, 1)

    offset = (1.0 - f) * mean                                # hoisted (bn, 1) term
    out = jnp.clip(f * x + offset, 0.0, 1.0)                 # whole-block blend
    out_ref[...] = out.astype(out_ref.dtype)                 # full-width unmasked store


def _round_up(x, m):
    return (x + m - 1) // m * m


def _pick_block_batch(n, row_elems, itemsize):
    """Images per block: large lane-dense blocks, but keep enough grid steps."""
    lane_pad = _round_up(row_elems, 128)
    per_img = lane_pad * itemsize                 # no sublane-padding waste in this layout
    budget = 6 * 1024 * 1024                      # per buffer; ~4 live buffers => ~24 MiB
    max_bn = max(1, budget // per_img)
    # Prefer >= 8 (else >= 4, else >= 2) grid steps when each step still moves
    # >= ~1 MiB, so double-buffering overlaps DMA/compute and both v7x TCs work.
    for steps in (8, 4, 2):
        cap = n // steps
        if cap >= 1 and cap * per_img >= (1 << 20):
            max_bn = min(max_bn, cap)
            break
    max_bn = int(max(1, min(max_bn, n)))
    bn = 1
    for d in range(1, max_bn + 1):                # largest divisor of n (no partial blocks)
        if n % d == 0:
            bn = d
    # Dtype-correct VMEM footprint: min sublane tile is 8 (f32), 16 (bf16), 32 (int8).
    sub = max(8, 32 // itemsize)
    block_bytes = _round_up(bn, sub) * lane_pad * itemsize
    return bn, block_bytes


def adjust_contrast_pallas(img: jax.Array, factor) -> jax.Array:
    """img: (N, 3, H, W) float array in [0, 1]. factor: scalar (traced ok)."""
    n, c, h, w = img.shape
    assert c == 3, "adjust_contrast expects 3-channel RGB (NCHW)"
    hw = h * w
    row = c * hw
    x = img.reshape(n, row)                        # channels concatenated on the lane axis

    itemsize = jnp.dtype(img.dtype).itemsize
    bn, block_bytes = _pick_block_batch(n, row, itemsize)
    grid = (n // bn,)

    # in + out, double-buffered, plus slack; well below v7x's 64 MiB physical VMEM.
    vmem_limit = int(min(max(4 * block_bytes + (2 << 20), 16 * 1024 * 1024),
                         48 * 1024 * 1024))

    scal = jnp.asarray(factor, jnp.float32).reshape(1)

    out = pl.pallas_call(
        _contrast_kernel,
        out_shape=jax.ShapeDtypeStruct((n, row), img.dtype),
        grid_spec=pltpu.PrefetchScalarGridSpec(
            num_scalar_prefetch=1,
            grid=grid,
            in_specs=[pl.BlockSpec((bn, row), lambda i, _s: (i, 0))],
            out_specs=pl.BlockSpec((bn, row), lambda i, _s: (i, 0)),
        ),
        compiler_params=pltpu.CompilerParams(
            dimension_semantics=("parallel",),
            vmem_limit_bytes=vmem_limit,
        ),
        cost_estimate=pl.CostEstimate(
            flops=8 * n * row,
            transcendentals=0,
            bytes_accessed=2 * n * row * itemsize,
        ),
    )(scal, x)
    return out.reshape(n, c, h, w)


class Contrast:
    """JAX/Pallas port of the PyTorch `Contrast` augmentation module."""

    def __init__(self, bounds=(0.9, 0.9), p=0.5):
        self.bounds = bounds
        self.p = p

    def __call__(self, key, img, label=None):
        k_factor, k_gate = jax.random.split(key)
        factor = jax.random.uniform(
            k_factor, (), minval=self.bounds[0], maxval=self.bounds[1]
        )
        apply = jax.random.uniform(k_gate, ()) < self.p
        # True fast path: gate-off skips the kernel (and its HBM traffic).
        out = jax.lax.cond(
            apply,
            lambda x: adjust_contrast_pallas(x, factor),
            lambda x: x,
            img,
        )
        return out, label


if __name__ == "__main__":
    key = jax.random.PRNGKey(0)
    k_img, k_mod = jax.random.split(key)

    # Small RGB batch: (N=2, C=3, H=16, W=16), values in [0, 1]
    img = jax.random.uniform(k_img, (2, 3, 16, 16), dtype=jnp.float32)

    # Pure-JAX reference of adjust_contrast(factor=0.9)
    factor = 0.9
    gray = 0.2989 * img[:, 0] + 0.587 * img[:, 1] + 0.114 * img[:, 2]
    mean = gray.mean(axis=(-2, -1), keepdims=True)[:, None]       # (N,1,1,1)
    ref_adj = jnp.clip(factor * img + (1.0 - factor) * mean, 0.0, 1.0)

    # Applied path
    adj = jax.block_until_ready(adjust_contrast_pallas(img, factor))
    assert adj.shape == img.shape and adj.dtype == img.dtype
    assert jnp.allclose(adj, ref_adj, atol=1e-5), "Pallas adjust_contrast mismatch"

    # Full module (random factor + p-gate via lax.cond fast path)
    module = Contrast(bounds=(0.9, 0.9), p=0.5)
    out, label = module(k_mod, img, label=None)
    out = jax.block_until_ready(out)
    assert out.shape == img.shape and out.dtype == img.dtype
    assert jnp.allclose(out, ref_adj, atol=1e-5) or jnp.allclose(out, img)

    print("KERNEL_OK")
</pallas_src>

<mosaic_0001>
module attributes {stable_mosaic.version = 11 : i64} {
  func.func @_contrast_kernel(%arg0: i32, %arg1: memref<1xf32, #tpu.memory_space<smem>>, %arg2: memref<2x768xf32, #tpu.memory_space<vmem>>, %arg3: memref<2x768xf32, #tpu.memory_space<vmem>>) attributes {dimension_semantics = [#tpu.dimension_semantics<parallel>], iteration_bounds = array<i64: 1>, scalar_prefetch = 1 : i64, scratch_operands = 0 : i64, tpu.core_type = #tpu.core_type<tc>, window_params = [{transform_indices = @transform_0, window_bounds = array<i64: 2, 768>}, {transform_indices = @transform_1, window_bounds = array<i64: 2, 768>}]} {
    %c0 = arith.constant 0 : index
    %0 = memref.load %arg1[%c0] : memref<1xf32, #tpu.memory_space<smem>>
    %c0_0 = arith.constant 0 : index
    %c0_1 = arith.constant 0 : index
    %1 = vector.load %arg2[%c0_0, %c0_1] : memref<2x768xf32, #tpu.memory_space<vmem>>, vector<2x768xf32>
    %2 = vector.extract_strided_slice %1 {offsets = [0, 0], sizes = [2, 256], strides = [1, 1]} : vector<2x768xf32> to vector<2x256xf32>
    %cst = arith.constant dense<0.000000e+00> : vector<2xf32>
    %3 = vector.multi_reduction <add>, %2, %cst [1] : vector<2x256xf32> to vector<2xf32>
    %4 = vector.shape_cast %3 : vector<2xf32> to vector<2x1xf32>
    %cst_2 = arith.constant 2.989000e-01 : f32
    %5 = vector.broadcast %cst_2 : f32 to vector<2x1xf32>
    %6 = arith.mulf %5, %4 : vector<2x1xf32>
    %7 = vector.extract_strided_slice %1 {offsets = [0, 256], sizes = [2, 256], strides = [1, 1]} : vector<2x768xf32> to vector<2x256xf32>
    %cst_3 = arith.constant dense<0.000000e+00> : vector<2xf32>
    %8 = vector.multi_reduction <add>, %7, %cst_3 [1] : vector<2x256xf32> to vector<2xf32>
    %9 = vector.shape_cast %8 : vector<2xf32> to vector<2x1xf32>
    %cst_4 = arith.constant 5.870000e-01 : f32
    %10 = vector.broadcast %cst_4 : f32 to vector<2x1xf32>
    %11 = arith.mulf %10, %9 : vector<2x1xf32>
    %12 = arith.addf %6, %11 : vector<2x1xf32>
    %13 = vector.extract_strided_slice %1 {offsets = [0, 512], sizes = [2, 256], strides = [1, 1]} : vector<2x768xf32> to vector<2x256xf32>
    %cst_5 = arith.constant dense<0.000000e+00> : vector<2xf32>
    %14 = vector.multi_reduction <add>, %13, %cst_5 [1] : vector<2x256xf32> to vector<2xf32>
    %15 = vector.shape_cast %14 : vector<2xf32> to vector<2x1xf32>
    %cst_6 = arith.constant 1.140000e-01 : f32
    %16 = vector.broadcast %cst_6 : f32 to vector<2x1xf32>
    %17 = arith.mulf %16, %15 : vector<2x1xf32>
    %18 = arith.addf %12, %17 : vector<2x1xf32>
    %cst_7 = arith.constant 3.906250e-03 : f32
    %19 = vector.broadcast %cst_7 : f32 to vector<2x1xf32>
    %20 = arith.mulf %18, %19 : vector<2x1xf32>
    %cst_8 = arith.constant 1.000000e+00 : f32
    %21 = arith.subf %cst_8, %0 : f32
    %22 = vector.broadcast %21 : f32 to vector<2x1xf32>
    %23 = arith.mulf %22, %20 : vector<2x1xf32>
    %24 = vector.broadcast %0 : f32 to vector<2x768xf32>
    %25 = arith.mulf %24, %1 : vector<2x768xf32>
    %26 = vector.broadcast %23 : vector<2x1xf32> to vector<2x768xf32>
    %27 = arith.addf %25, %26 : vector<2x768xf32>
    %cst_9 = arith.constant 0.000000e+00 : f32
    %cst_10 = arith.constant 1.000000e+00 : f32
    %28 = vector.broadcast %cst_9 : f32 to vector<2x768xf32>
    %29 = arith.maximumf %28, %27 : vector<2x768xf32>
    %30 = vector.broadcast %cst_10 : f32 to vector<2x768xf32>
    %31 = arith.minimumf %30, %29 : vector<2x768xf32>
    %c0_11 = arith.constant 0 : index
    %c0_12 = arith.constant 0 : index
    %32 = vector.load %arg3[%c0_11, %c0_12] : memref<2x768xf32, #tpu.memory_space<vmem>>, vector<2x768xf32>
    tpu.vector_store %arg3[%c0_11, %c0_12], %31 {strides = array<i32>} : memref<2x768xf32, #tpu.memory_space<vmem>>, vector<2x768xf32>,
    return
  }
  func.func @transform_0(%arg0: i32, %arg1: memref<1xf32, #tpu.memory_space<smem>>) -> (i32, i32) {
    %c0_i32 = arith.constant 0 : i32
    %c0_i32_0 = arith.constant 0 : i32
    return %arg0, %c0_i32 : i32, i32
  }
  func.func @transform_1(%arg0: i32, %arg1: memref<1xf32, #tpu.memory_space<smem>>) -> (i32, i32) {
    %c0_i32 = arith.constant 0 : i32
    %c0_i32_0 = arith.constant 0 : i32
    return %arg0, %c0_i32 : i32, i32
  }
}

</mosaic_0001>

<llo_original>
// kernel: tpu_custom_call.1
$region0: #{tpu_custom_call.1}
  #allocation0 [shape = 'u32[]', space=smem, size = 0x4, offset = 0x4, fixed_abs, tag = 'smem constant byte address 0x4 - core index']
  #allocation1 [shape = 'u32[144,128]{1,0:T(1,128)}', space=vmem, size = 0x12000, scoped, tag = 'internal scratch']
  #allocation2 [shape = 's32[1]{0}', space=sflag, size = 0x4, scoped, tag = 'scoped memory for tpu_custom_call.1']
  #allocation3 [shape = 'f32[1]{0:T(128)S(6)}', space=smem, size = 0x200, scoped, tag = 'prefetched SMEM operand 0']
  %s0 = inlined_call_operand.<no memory space> [shape: f32[1], index: 0, kind: input, shape index: {}]
  %s1 = inlined_call_operand.hbm [shape: f32[2,768], index: 1, kind: input, shape index: {}]
  %s2 = inlined_call_operand.hbm [shape: f32[2,768], index: 2, kind: output, shape index: {}]
  %s3 = sld [smem:[#allocation0]]
  $region18: #{tpu_custom_call.1} parent=0
    _
  %s5 = ssub.s32 1, %s3
  %s6 = scalar_select 0, %s5, %s3
  %7 = sst [smem:[#allocation3]] %s0
  $region1: #{tpu_custom_call.1} parent=0
    #allocation4 [shape = 'u8[6144]{0}', space=vmem, size = 0x1800, scoped, tag = 'input window, operand 1, single buffered']
    #allocation5 [shape = 's32[1]{0}', space=sflag, size = 0x4, scoped, tag = 'scoped memory for tpu_custom_call.1']
    #allocation6 [shape = 's32[1]{0}', space=sflag, size = 0x4, scoped, tag = 'scoped memory for tpu_custom_call.1']
    #allocation7 [shape = 'u8[6144]{0}', space=vmem, size = 0x1800, scoped, tag = 'output window, operand 0, single buffered']
    %8 = vsyncpa [#allocation5], 0
    %9 = vsyncpa [#allocation6], 0
    // Predicated region
    $region2: #{tpu_custom_call.1} parent=1 // pred_check
      _
    $region3: #{tpu_custom_call.1} parent=1 // pred_check_branch
      %11 = sbr.rel (0) target = $region5
    $region4: #{tpu_custom_call.1} parent=1 // pred_region
      %s13 = ssub.s32 192, 192
      %14 = vsyncadd [#allocation5], %s13
      %s16 = sshll.u32 [#allocation4], 4
      %s17 = int_to_ptr.vmem [resolvable:$true] %s16
      %19 = dma.hbm_to_vmem [thread:$0]  %s1, 192, %s17, [#allocation5]
    $region5: #{tpu_custom_call.1} parent=1 // pred_fallthru
      _
    // Predicated region
    $region6: #{tpu_custom_call.1} parent=1 // pred_check
      _
    $region7: #{tpu_custom_call.1} parent=1 // pred_check_branch
      %21 = sbr.rel (0) target = $region9
    $region8: #{tpu_custom_call.1} parent=1 // pred_region
      %22 = dma.done [#allocation5], 192
    $region9: #{tpu_custom_call.1} parent=1 // pred_fallthru
      _
    %s23 = sld [smem:[#allocation3]]
    %v24 = vld [vmem:[#allocation4] sm:$0xff]
    %v25 = vld [vmem:[#allocation4 + $0x8] sm:$0xf]
    %v28 = vunpack.c.l.s4 1983009808
    %v29 = vunpack.c.0.s8 %v28
    %v30 = vlaneseq
    %v31 = vshrl.u32 %v30, 7
    %v32 = vsub.s32 %v29, %v31
    %v33 = vrot.slane %v24, %v32
    %v34 = vcombine.high %v33, %v33
    %vm37 = vcmask 1041408
    %v38 = vsel %vm37, %v33, 0.0
    %v39 = vsel %vm37, %v34, 0.0
    %v40 = vadd.f32 %v38, %v39
    %41 = vadd.xlane.f32.xlu0 %v40
    %v42 = vpop.xlane.xlu0 %41
    %v43 = vmul.f32 %v42, 0.2989
    %v44 = vcombine.high %v24, %v24
    %v46 = vunpack.c.l.s4 1983009808
    %v47 = vunpack.c.0.s8 %v46
    %v48 = vlaneseq
    %v49 = vshrl.u32 %v48, 7
    %v50 = vsub.s32 %v47, %v49
    %v51 = vrot.slane %v44, %v50
    %v52 = vcombine.high %v51, %v51
    %v55 = vsel %vm37, %v51, 0.0
    %v56 = vsel %vm37, %v52, 0.0
    %v57 = vadd.f32 %v55, %v56
    %58 = vadd.xlane.f32.xlu0 %v57
    %v59 = vpop.xlane.xlu0 %58
    %v60 = vmul.f32 %v59, 0.587
    %v61 = vadd.f32 %v43, %v60
    %v64 = vunpack.c.l.s4 1983009808
    %v65 = vunpack.c.0.s8 %v64
    %v66 = vlaneseq
    %v67 = vshrl.u32 %v66, 7
    %v68 = vsub.s32 %v65, %v67
    %v69 = vrot.slane %v25, %v68
    %v70 = vcombine.high %v69, %v69
    %v73 = vsel %vm37, %v69, 0.0
    %v74 = vsel %vm37, %v70, 0.0
    %v75 = vadd.f32 %v73, %v74
    %76 = vadd.xlane.f32.xlu0 %v75
    %v77 = vpop.xlane.xlu0 %76
    %v78 = vmul.f32 %v77, 0.114
    %v79 = vadd.f32 %v61, %v78
    %v80 = vmul.f32 %v79, 0.00390625
    %s81 = ssub.f32 1.0, %s23
    %v82 = vstv %s81
    %v83 = vmul.f32 %v82, %v80
    %v84 = vstv %s23
    %v85 = vmul.f32 %v84, %v24
    %v86 = vmul.f32 %v84, %v25
    %v89 = vunpack.c.l.s4 269488144
    %v90 = vunpack.c.0.s8 %v89
    %v91 = vlaneseq
    %v92 = vshrl.u32 %v91, 7
    %v93 = vsub.s32 %v90, %v92
    %v94 = vrot.slane %v83, %v93
    %v96 = vadd.f32 %v85, %v94
    %v97 = vadd.f32 %v86, %v94
    %v98 = vmax.f32 %v96, 0.0
    %v99 = vmax.f32 %v97, 0.0
    %v100 = vmin.f32 %v98, 1.0
    %v101 = vmin.f32 %v99, 1.0
    %102 = vst [vmem:[#allocation7] sm:$0xff] %v100
    %103 = vst [vmem:[#allocation7 + $0x8] sm:$0xf] %v101
    // Predicated region
    $region10: #{tpu_custom_call.1} parent=1 // pred_check
      _
    $region11: #{tpu_custom_call.1} parent=1 // pred_check_branch
      %105 = sbr.rel (0) target = $region13
    $region12: #{tpu_custom_call.1} parent=1 // pred_region
      %s107 = ssub.s32 192, 192
      %108 = vsyncadd [#allocation6], %s107
      %s110 = sshll.u32 [#allocation7], 4
      %s111 = int_to_ptr.vmem [resolvable:$true] %s110
      %113 = dma.vmem_to_hbm [thread:$0]  %s111, 192, %s2, [#allocation6]
    $region13: #{tpu_custom_call.1} parent=1 // pred_fallthru
      _
    // Predicated region
    $region14: #{tpu_custom_call.1} parent=1 // pred_check
      _
    $region15: #{tpu_custom_call.1} parent=1 // pred_check_branch
      %115 = sbr.rel (0) target = $region17
    $region16: #{tpu_custom_call.1} parent=1 // pred_region
      %116 = dma.done [#allocation6], 192
    $region17: #{tpu_custom_call.1} parent=1 // pred_fallthru
      _
    %117 = vsyncpa [#allocation5], 1
    %118 = vsyncpa [#allocation6], 1

</llo_original>
